<compile_context>
chip_gen: v7x
topology: tpu7x:2x2x1
jax: 0.10.0
libtpu: 0.0.40
codegen_flags: <defaults>
</compile_context>

<pallas_src>
import functools
from math import pi, sqrt

import jax
import jax.numpy as jnp
import numpy as np
from jax.experimental import pallas as pl
from jax.experimental.pallas import tpu as pltpu

LANE = 128
SUBLANE = 8


def get_factor(l):
    # TODO(synk): get_factor() is referenced but not defined in the provided
    # spec; using the standard normalization sqrt((2l+1)/(4*pi)).  It is a pure
    # per-channel scalar, so the kernel structure is independent of its value.
    return sqrt((2 * l + 1) / (4.0 * pi))


def _channel_multipliers(l):
    """Per-output-channel scalar factors, replicating the torch branches exactly
    (note: the l == 1 branch of the reference does NOT scale P0)."""
    if l == 0:
        return (get_factor(0),)
    if l == 1:
        return (1.0, get_factor(1))
    return tuple(get_factor(i) for i in range(l))


# ------------------------------- kernel ---------------------------------------
def legendre_kernel(x_ref, out_ref, *, mults):
    """x_ref: (block_rows, 128) in the input dtype; out_ref: (n_ch, block_rows, 128)."""
    n_ch = len(mults)
    out_dtype = out_ref.dtype
    # P0 channel is a constant fill.
    out_ref[0] = jnp.full(out_ref.shape[1:], mults[0], out_dtype)
    if n_ch >= 2:
        x = x_ref[...].astype(jnp.float32)       # f32 recurrence (v5e has no bf16 VPU)
        out_ref[1] = (x * mults[1]).astype(out_dtype)
        p_prev = jnp.ones_like(x)                # P_{i-2}
        p_cur = x                                # P_{i-1}
        for i in range(2, n_ch):                 # unrolled: n_ch is static
            # Matches the reference recurrence (including its indexing):
            #   P = 1/(i+1) * ((2i+1) * x * retvars[i-1] - i * retvars[i-2])
            p_next = (1.0 / (i + 1)) * ((2 * i + 1) * x * p_cur - i * p_prev)
            out_ref[i] = (p_next * mults[i]).astype(out_dtype)
            p_prev, p_cur = p_cur, p_next


# ------------------------------- helpers --------------------------------------
def _round_up(a, b):
    return ((a + b - 1) // b) * b


def _row_align(dtype):
    # Sublane alignment: 8 rows for 32-bit, 16 for 16-bit, 32 for 8-bit dtypes.
    return max(SUBLANE, 32 // jnp.dtype(dtype).itemsize)


def _vmem_caps():
    """Returns (vmem_limit_cap_bytes, per-tile byte budget) from physical VMEM."""
    phys = 64 << 20                                   # conservative default (v7x per-TC)
    try:
        info = pltpu.get_tpu_info()
        v = getattr(info, "vmem_capacity_bytes", None)
        if v:
            phys = int(v)
    except Exception:
        pass
    limit_cap = max(32 << 20, min((phys * 3) // 4, 96 << 20))
    tile_budget = (limit_cap * 7) // 10               # headroom for Mosaic scratch
    return limit_cap, tile_budget


def _legendre_plain(data, mults):
    """Plain-JAX fast path (same math, native dtype), channel-last."""
    chans = [jnp.ones_like(data)]
    if len(mults) >= 2:
        chans.append(data)
        for i in range(2, len(mults)):
            p = 1 / (i + 1) * ((2 * i + 1) * data * chans[i - 1] - i * chans[i - 2])
            chans.append(p)
    chans = [c * m for c, m in zip(chans, mults)]
    return jnp.stack(chans, axis=-1)


# ------------------------------- wrapper --------------------------------------
def legendre_expand(data, l, *, block_rows=None, channels_last=True,
                    use_pallas=None, min_pallas_elements=1 << 18):
    """Pallas equivalent of legendre_expansion(l).forward(data).

    data: (B, N, M) array.  Returns data.shape + (L,) (torch stack(dim=3)) when
    channels_last=True; (L,) + data.shape (no transpose) when channels_last=False.
    """
    mults = _channel_multipliers(l)
    n_ch = len(mults)
    orig_shape = data.shape
    dtype = data.dtype
    r = data.size

    # ---- small-input / trivial-degree fast path -------------------------------
    if use_pallas is None:
        use_pallas = (l >= 2) and (r >= min_pallas_elements)
    if not use_pallas:
        out = _legendre_plain(data, mults)
        return out if channels_last else jnp.moveaxis(out, -1, 0)

    # ---- lane-dense layout: (rows, 128); pad only when not already aligned ----
    x = data.reshape(-1)
    r_pad = _round_up(r, SUBLANE * LANE)              # minimal pad: 8x128 multiple
    if r_pad != r:
        x = jnp.pad(x, (0, r_pad - r))
    rows = r_pad // LANE

    # ---- tile sizing from VMEM budget (double-buffered in+out + f32 temps) ----
    align_rows = _row_align(dtype)
    in_b = jnp.dtype(dtype).itemsize
    out_b = in_b
    bytes_per_row = LANE * (2 * in_b + 2 * n_ch * out_b + 6 * 4)
    limit_cap, tile_budget = _vmem_caps()
    if block_rows is None:
        br = max(align_rows, (tile_budget // bytes_per_row) // align_rows * align_rows)
        br = min(br, 2048)                            # ~4-8 MiB of output per tile
        br = min(br, _round_up(rows, align_rows))
        n_tiles = pl.cdiv(rows, br)
        if n_tiles > 1 and n_tiles % 2 == 1:          # even split across v7x's two TCs
            br = _round_up(pl.cdiv(rows, n_tiles + 1), align_rows)
            n_tiles = pl.cdiv(rows, br)
        block_rows = br
    else:
        block_rows = max(align_rows, _round_up(block_rows, align_rows))
        n_tiles = pl.cdiv(rows, block_rows)
    vmem_limit = int(min(limit_cap,
                         max(block_rows * bytes_per_row + (4 << 20), 32 << 20)))

    x2 = x.reshape(rows, LANE)
    out = pl.pallas_call(
        functools.partial(legendre_kernel, mults=mults),
        out_shape=jax.ShapeDtypeStruct((n_ch, rows, LANE), dtype),
        grid=(n_tiles,),
        in_specs=[pl.BlockSpec((block_rows, LANE), lambda i: (i, 0))],
        out_specs=pl.BlockSpec((n_ch, block_rows, LANE), lambda i: (0, i, 0)),
        compiler_params=pltpu.CompilerParams(
            dimension_semantics=("parallel",),
            vmem_limit_bytes=vmem_limit,
        ),
    )(x2)

    out = out.reshape(n_ch, r_pad)
    if r_pad != r:
        out = out[:, :r]
    out = out.reshape((n_ch,) + orig_shape)
    if not channels_last:
        return out                                    # channel-major: no transpose
    # TODO(synk): torch's trailing-L layout needs a lane-level channel interleave
    # that cannot be expressed as dense 128-lane TPU stores; XLA does it here.
    return jnp.moveaxis(out, 0, -1)


# --------------------------- plain-JAX reference -------------------------------
def legendre_reference(data, l):
    """Direct transcription of the torch forward."""
    P0 = jnp.ones_like(data)
    P1 = data
    if l == 0:
        return (P0 * get_factor(0))[..., None]
    if l == 1:
        return jnp.stack([P0, P1 * get_factor(1)], axis=-1)
    retvars = [P0, P1]
    for i in range(2, l):
        P = 1 / (i + 1) * ((2 * i + 1) * data * retvars[i - 1] - i * retvars[i - 2])
        retvars.append(P)
    retvars = [v * get_factor(i) for i, v in enumerate(retvars)]
    return jnp.stack(retvars, axis=-1)


# --------------------------------- main ----------------------------------------
if __name__ == "__main__":
    key = jax.random.PRNGKey(0)
    cases = [
        # (shape, l, dtype, wrapper kwargs)
        ((2, 16, 16), 0, jnp.float32, dict(use_pallas=True)),      # l==0 branch via kernel + pad path
        ((2, 16, 16), 1, jnp.float32, dict(use_pallas=True)),      # l==1 branch via kernel
        ((2, 16, 16), 6, jnp.float32, dict()),                     # auto -> small-input fast path
        ((3, 5, 7), 4, jnp.float32, dict(use_pallas=True)),        # ragged flat size -> minimal pad
        ((4, 72, 128), 6, jnp.float32, dict(use_pallas=True, block_rows=64)),  # multi-tile + ragged last tile
        ((2, 96, 128), 5, jnp.bfloat16, dict(use_pallas=True)),    # narrow dtype preserved end-to-end
    ]
    for idx, (shape, l, dtype, kw) in enumerate(cases):
        k = jax.random.fold_in(key, idx)
        data = jax.random.uniform(k, shape, jnp.float32, -1.0, 1.0).astype(dtype)
        fwd = jax.jit(functools.partial(legendre_expand, l=l, **kw))
        out = jax.block_until_ready(fwd(data))
        ref = legendre_reference(data, l)
        assert out.shape == ref.shape, (l, out.shape, ref.shape)
        assert out.dtype == ref.dtype, (l, out.dtype, ref.dtype)
        tol = 5e-2 if dtype == jnp.bfloat16 else 1e-5
        np.testing.assert_allclose(np.asarray(out, np.float32),
                                   np.asarray(ref, np.float32),
                                   rtol=tol, atol=tol)
    print("KERNEL_OK")
</pallas_src>

<mosaic_0001>
module attributes {stable_mosaic.version = 11 : i64} {
  func.func @legendre_kernel(%arg0: i32, %arg1: memref<8x128xf32, #tpu.memory_space<vmem>>, %arg2: memref<1x8x128xf32, #tpu.memory_space<vmem>>) attributes {dimension_semantics = [#tpu.dimension_semantics<parallel>], iteration_bounds = array<i64: 1>, scalar_prefetch = 0 : i64, scratch_operands = 0 : i64, tpu.core_type = #tpu.core_type<tc>, window_params = [{transform_indices = @transform_0, window_bounds = array<i64: 8, 128>}, {transform_indices = @transform_1, window_bounds = array<i64: 1, 8, 128>}]} {
    %cst = arith.constant 0.282094806 : f32
    %0 = vector.broadcast %cst : f32 to vector<8x128xf32>
    %c0 = arith.constant 0 : index
    %c0_0 = arith.constant 0 : index
    %c0_1 = arith.constant 0 : index
    %1 = vector.load %arg2[%c0, %c0_0, %c0_1] : memref<1x8x128xf32, #tpu.memory_space<vmem>>, vector<1x8x128xf32>
    %2 = vector.shape_cast %1 : vector<1x8x128xf32> to vector<8x128xf32>
    %3 = vector.shape_cast %0 : vector<8x128xf32> to vector<1x8x128xf32>
    tpu.vector_store %arg2[%c0, %c0_0, %c0_1], %3 {strides = array<i32>} : memref<1x8x128xf32, #tpu.memory_space<vmem>>, vector<1x8x128xf32>,
    return
  }
  func.func @transform_0(%arg0: i32) -> (i32, i32) {
    %c0_i32 = arith.constant 0 : i32
    %c0_i32_0 = arith.constant 0 : i32
    return %arg0, %c0_i32 : i32, i32
  }
  func.func @transform_1(%arg0: i32) -> (i32, i32, i32) {
    %c0_i32 = arith.constant 0 : i32
    %c0_i32_0 = arith.constant 0 : i32
    %c0_i32_1 = arith.constant 0 : i32
    return %c0_i32, %arg0, %c0_i32_0 : i32, i32, i32
  }
}

</mosaic_0001>

<llo_original>
// kernel: legendre_expand.1
$region0: #{legendre_expand.1}
  #allocation0 [shape = 'u32[]', space=smem, size = 0x4, offset = 0x4, fixed_abs, tag = 'smem constant byte address 0x4 - core index']
  #allocation1 [shape = 'u32[144,128]{1,0:T(1,128)}', space=vmem, size = 0x12000, scoped, tag = 'internal scratch']
  %s0 = inlined_call_operand.vmem [shape: f32[8,128], index: 0, kind: input, shape index: {}]
  %s1 = inlined_call_operand.vmem [shape: f32[1,8,128], index: 1, kind: output, shape index: {}]
  %s2 = sld [smem:[#allocation0]]
  $region14: #{legendre_expand.1} parent=0
    _
  %s4 = ssub.s32 1, %s2
  %s5 = scalar_select 0, %s4, %s2
  // Predicated region
  $region2: #{legendre_expand.1} parent=0 // pred_check
    _
  $region3: #{legendre_expand.1} parent=0 // pred_check_branch
    %7 = sbr.rel (0) target = $region5
  $region4: #{legendre_expand.1} parent=0 // pred_region
    _
  $region5: #{legendre_expand.1} parent=0 // pred_fallthru
    _
  %8 = vst [vmem:[%s1] sm:$0xff] 0.2820948
  // Predicated region
  $region6: #{legendre_expand.1} parent=0 // pred_check
    _
  $region7: #{legendre_expand.1} parent=0 // pred_check_branch
    %10 = sbr.rel (0) target = $region9
  $region8: #{legendre_expand.1} parent=0 // pred_region
    _
  $region9: #{legendre_expand.1} parent=0 // pred_fallthru
    _
  // Predicated region
  $region10: #{legendre_expand.1} parent=0 // pred_check
    _
  $region11: #{legendre_expand.1} parent=0 // pred_check_branch
    %12 = sbr.rel (0) target = $region13
  $region12: #{legendre_expand.1} parent=0 // pred_region
    _
  $region13: #{legendre_expand.1} parent=0 // pred_fallthru
    _

</llo_original>
